<compile_context>
chip_gen: v6e
topology: v6e:2x2x1
jax: 0.10.0
libtpu: 0.0.40
codegen_flags: <defaults>
</compile_context>

<pallas_src>
import jax
import jax.numpy as jnp
from jax.experimental import pallas as pl
from jax.experimental.pallas import tpu as pltpu


_NEG_BIG = -1e30   # bias for padded weight-head lanes -> exp() underflows to 0
_C_OFF = 64        # weight head starts at this lane; total output lanes = 128


def _round_up(n, m):
    return ((n + m - 1) // m) * m


def _make_kernel(in_pad, hidden, c_off, r_b1, r_w2, r_b2):
    """Build the fused forward kernel with compile-time layout constants."""

    def kernel(x_ref, body_ref, head_ref, out_ref):
        x = x_ref[...]                                     # (TB, in_pad)

        # Unpack parameters (static slices on VMEM refs -> no runtime cost).
        w1 = body_ref[pl.ds(0, in_pad), :]                 # (in_pad, hidden)
        b1 = body_ref[pl.ds(r_b1, 1), :]                   # (1, hidden)
        w2 = body_ref[pl.ds(r_w2, hidden), :]              # (hidden, hidden)
        b2 = body_ref[pl.ds(r_b2, 1), :]                   # (1, hidden)
        wh = head_ref[pl.ds(0, hidden), :]                 # (hidden, 128)
        bh = head_ref[pl.ds(hidden, 1), :]                 # (1, 128)

        # fc1 + relu, fc2 + relu
        h1 = jnp.maximum(
            jnp.dot(x, w1, preferred_element_type=jnp.float32) + b1, 0.0)
        h2 = jnp.maximum(
            jnp.dot(h1, w2, preferred_element_type=jnp.float32) + b2, 0.0)

        # One dot produces both heads: activation logits in lanes [0:c_off),
        # weight logits in lanes [c_off:128).
        logits = jnp.dot(h2, wh, preferred_element_type=jnp.float32) + bh

        # Activation head: hard threshold. sigmoid(z) > 0.5  <=>  z > 0
        # (also at z == 0 both are False), so no transcendental is needed.
        hard = (logits > 0.0).astype(jnp.float32)

        # Weight head: softmax over lanes [c_off:128). Activation lanes are
        # masked with -1e30 so exp underflows to 0; the padded weight lanes
        # already carry a -1e30 bias (set in pack_params) and contribute 0.
        lane = jax.lax.broadcasted_iota(jnp.int32, logits.shape, 1)
        is_w = lane >= c_off
        wlog = jnp.where(is_w, logits, jnp.float32(_NEG_BIG))
        m = jnp.max(wlog, axis=1, keepdims=True)
        e = jnp.exp(wlog - m)
        denom = jnp.sum(e, axis=1, keepdims=True)
        sm = e / denom                                     # exact reciprocal

        # Single lane-dense 128-wide store: [hard | softmax].
        out_ref[...] = jnp.where(is_w, sm, hard)

    return kernel


def pack_params(params, input_dim, hidden_dim, num_classifiers):
    """Pack the 8 parameter tensors into two TPU-friendly VMEM slabs."""
    assert hidden_dim % 8 == 0, "hidden_dim must be a multiple of 8"
    assert num_classifiers <= _C_OFF, "num_classifiers must fit in 64 lanes"
    in_pad = _round_up(input_dim, 8)

    # body slab rows: [w1 | b1(+pad) | w2 | b2(+pad)], each segment 8-aligned.
    r_b1 = in_pad
    r_w2 = r_b1 + 8
    r_b2 = r_w2 + hidden_dim
    body_rows = r_b2 + 8

    body = jnp.zeros((body_rows, hidden_dim), jnp.float32)
    body = body.at[:input_dim, :].set(params["w1"])
    body = body.at[r_b1, :].set(params["b1"].reshape(-1))
    body = body.at[r_w2:r_w2 + hidden_dim, :].set(params["w2"])
    body = body.at[r_b2, :].set(params["b2"].reshape(-1))

    # head slab: lanes [0:64) = activation head, [64:128) = weight head.
    # INVARIANT: the padded weight-head columns (lanes >= 64+num_classifiers)
    # must keep exactly-zero weights; only then does their -1e30 bias make
    # exp() underflow to 0 in the kernel softmax.
    head = jnp.zeros((hidden_dim + 8, 2 * _C_OFF), jnp.float32)
    head = head.at[:hidden_dim, :num_classifiers].set(params["wa"])
    head = head.at[:hidden_dim, _C_OFF:_C_OFF + num_classifiers].set(params["ww"])
    head = head.at[hidden_dim, :num_classifiers].set(params["ba"].reshape(-1))
    head = head.at[hidden_dim, _C_OFF + num_classifiers:].set(_NEG_BIG)
    head = head.at[hidden_dim, _C_OFF:_C_OFF + num_classifiers].set(
        params["bw"].reshape(-1))

    meta = dict(in_pad=in_pad, c_off=_C_OFF, r_b1=r_b1, r_w2=r_w2, r_b2=r_b2,
                hidden=hidden_dim, input_dim=input_dim,
                num_classifiers=num_classifiers)
    return body, head, meta


def _pick_tile(B):
    """Batch tile: multiple of 8, capped at 2048; >=2 grid steps for large B
    so the 'parallel' axis can shard across v7x's two TensorCores."""
    tb = min(_round_up(B, 8), 2048)
    b_pad = _round_up(B, tb)
    if b_pad // tb == 1 and tb >= 1024:
        tb = tb // 2                      # stays a multiple of 8
        b_pad = _round_up(B, tb)
    return tb, b_pad


def weight_generator_forward_packed(x, body, head, meta):
    """x: (B, input_dim). Returns the packed (b_pad, 128) f32 output:
    lanes [0:C) = activation (0/1), lanes [64:64+C) = softmax weights.
    Prefer consuming this directly to avoid an extra HBM round trip."""
    B = x.shape[0]
    in_pad = meta["in_pad"]
    input_dim = meta["input_dim"]
    hidden = meta["hidden"]
    c_off = meta["c_off"]
    lanes = 2 * c_off

    tb, b_pad = _pick_tile(B)
    n_steps = b_pad // tb

    # Single pad op (batch + feature padding in one XLA pass).
    x_pad = jnp.pad(x.astype(jnp.float32),
                    ((0, b_pad - B), (0, in_pad - input_dim)))

    kernel = _make_kernel(in_pad, hidden, c_off,
                          meta["r_b1"], meta["r_w2"], meta["r_b2"])

    flops = 2 * b_pad * (in_pad * hidden + hidden * hidden + hidden * lanes)
    bytes_accessed = 4 * (b_pad * in_pad + body.size + head.size + b_pad * lanes)

    out = pl.pallas_call(
        kernel,
        out_shape=jax.ShapeDtypeStruct((b_pad, lanes), jnp.float32),
        grid=(n_steps,),
        in_specs=[
            pl.BlockSpec((tb, in_pad), lambda i: (i, 0)),
            pl.BlockSpec(body.shape, lambda i: (0, 0)),   # resident across steps
            pl.BlockSpec(head.shape, lambda i: (0, 0)),   # resident across steps
        ],
        out_specs=pl.BlockSpec((tb, lanes), lambda i: (i, 0)),
        compiler_params=pltpu.CompilerParams(
            dimension_semantics=("parallel",)),
        cost_estimate=pl.CostEstimate(
            flops=flops, transcendentals=b_pad * lanes,
            bytes_accessed=bytes_accessed),
    )(x_pad, body, head)
    return out


def weight_generator_forward(x, body, head, meta):
    """Convenience wrapper returning (activation, weights), each (B, C) f32."""
    out = weight_generator_forward_packed(x, body, head, meta)
    B = x.shape[0]
    C = meta["num_classifiers"]
    c_off = meta["c_off"]
    return out[:B, :C], out[:B, c_off:c_off + C]


def init_params(key, input_dim=7, hidden_dim=32, num_classifiers=11):
    """PyTorch nn.Linear-style init; weights stored as (in_features, out_features)."""
    ks = jax.random.split(key, 8)

    def lin(kw, kb, fan_in, fan_out):
        bound = 1.0 / jnp.sqrt(jnp.float32(fan_in))
        w = jax.random.uniform(kw, (fan_in, fan_out), jnp.float32, -bound, bound)
        b = jax.random.uniform(kb, (1, fan_out), jnp.float32, -bound, bound)
        return w, b

    w1, b1 = lin(ks[0], ks[1], input_dim, hidden_dim)
    w2, b2 = lin(ks[2], ks[3], hidden_dim, hidden_dim)
    wa, ba = lin(ks[4], ks[5], hidden_dim, num_classifiers)
    ww, bw = lin(ks[6], ks[7], hidden_dim, num_classifiers)
    return dict(w1=w1, b1=b1, w2=w2, b2=b2, wa=wa, ba=ba, ww=ww, bw=bw)


def reference_forward(x, p):
    """Pure-JAX reference mirroring the PyTorch forward (true-f32 matmuls)."""
    hp = jax.lax.Precision.HIGHEST
    h1 = jax.nn.relu(jnp.dot(x, p["w1"], precision=hp) + p["b1"])
    h2 = jax.nn.relu(jnp.dot(h1, p["w2"], precision=hp) + p["b2"])
    probs = jax.nn.sigmoid(jnp.dot(h2, p["wa"], precision=hp) + p["ba"])
    hard = (probs > 0.5).astype(jnp.float32)
    activation = (hard - probs) + probs   # forward value == hard
    weights = jax.nn.softmax(jnp.dot(h2, p["ww"], precision=hp) + p["bw"], axis=1)
    return activation, weights


if __name__ == "__main__":
    key = jax.random.PRNGKey(0)
    k_param, k_x = jax.random.split(key)

    input_dim, hidden_dim, num_classifiers = 7, 32, 11
    batch = 8

    params = init_params(k_param, input_dim, hidden_dim, num_classifiers)
    x = jax.random.normal(k_x, (batch, input_dim), jnp.float32)

    body, head, meta = pack_params(params, input_dim, hidden_dim, num_classifiers)

    act, wgt = weight_generator_forward(x, body, head, meta)
    act = jax.block_until_ready(act)
    wgt = jax.block_until_ready(wgt)

    # correctness check against pure-JAX reference
    act_ref, wgt_ref = reference_forward(x, params)
    assert act.shape == (batch, num_classifiers)
    assert wgt.shape == (batch, num_classifiers)
    assert jnp.allclose(act, act_ref, atol=1e-5), "activation mismatch"
    assert jnp.allclose(wgt, wgt_ref, atol=1e-4), "weights mismatch"
    assert jnp.allclose(jnp.sum(wgt, axis=1), 1.0, atol=1e-4), "softmax rows must sum to 1"

    print("KERNEL_OK")
</pallas_src>

<mosaic_0001>
module attributes {stable_mosaic.version = 11 : i64} {
  func.func @kernel(%arg0: i32, %arg1: memref<8x8xf32, #tpu.memory_space<vmem>>, %arg2: memref<56x32xf32, #tpu.memory_space<vmem>>, %arg3: memref<40x128xf32, #tpu.memory_space<vmem>>, %arg4: memref<8x128xf32, #tpu.memory_space<vmem>>) attributes {dimension_semantics = [#tpu.dimension_semantics<parallel>], iteration_bounds = array<i64: 1>, scalar_prefetch = 0 : i64, scratch_operands = 0 : i64, tpu.core_type = #tpu.core_type<tc>, window_params = [{transform_indices = @transform_0, window_bounds = array<i64: 8, 8>}, {pipeline_mode = #tpu.pipeline_mode<synchronous>, transform_indices = @transform_1, window_bounds = array<i64: 56, 32>}, {pipeline_mode = #tpu.pipeline_mode<synchronous>, transform_indices = @transform_2, window_bounds = array<i64: 40, 128>}, {transform_indices = @transform_3, window_bounds = array<i64: 8, 128>}]} {
    %c0 = arith.constant 0 : index
    %c0_0 = arith.constant 0 : index
    %0 = vector.load %arg1[%c0, %c0_0] : memref<8x8xf32, #tpu.memory_space<vmem>>, vector<8x8xf32>
    %c0_1 = arith.constant 0 : index
    %c0_2 = arith.constant 0 : index
    %1 = vector.load %arg2[%c0_1, %c0_2] : memref<56x32xf32, #tpu.memory_space<vmem>>, vector<8x32xf32>
    %c8 = arith.constant 8 : index
    %c0_3 = arith.constant 0 : index
    %2 = vector.load %arg2[%c8, %c0_3] : memref<56x32xf32, #tpu.memory_space<vmem>>, vector<1x32xf32>
    %c16 = arith.constant 16 : index
    %c0_4 = arith.constant 0 : index
    %3 = vector.load %arg2[%c16, %c0_4] : memref<56x32xf32, #tpu.memory_space<vmem>>, vector<32x32xf32>
    %c48 = arith.constant 48 : index
    %c0_5 = arith.constant 0 : index
    %4 = vector.load %arg2[%c48, %c0_5] : memref<56x32xf32, #tpu.memory_space<vmem>>, vector<1x32xf32>
    %c0_6 = arith.constant 0 : index
    %c0_7 = arith.constant 0 : index
    %5 = vector.load %arg3[%c0_6, %c0_7] : memref<40x128xf32, #tpu.memory_space<vmem>>, vector<32x128xf32>
    %c32 = arith.constant 32 : index
    %c0_8 = arith.constant 0 : index
    %6 = vector.load %arg3[%c32, %c0_8] : memref<40x128xf32, #tpu.memory_space<vmem>>, vector<1x128xf32>
    %cst = arith.constant dense<0.000000e+00> : vector<8x32xf32>
    %7 = tpu.matmul %0, %1, %cst {dimension_numbers = #tpu.dot_dimension_numbers<[1], [0], [0], [1], [0, 0, 1, 1], [], []>} : vector<8x8xf32>, vector<8x32xf32>, vector<8x32xf32> -> vector<8x32xf32>
    %8 = vector.broadcast %2 : vector<1x32xf32> to vector<8x32xf32>
    %9 = arith.addf %7, %8 : vector<8x32xf32>
    %cst_9 = arith.constant 0.000000e+00 : f32
    %10 = vector.broadcast %cst_9 : f32 to vector<8x32xf32>
    %11 = arith.maximumf %9, %10 : vector<8x32xf32>
    %cst_10 = arith.constant dense<0.000000e+00> : vector<8x32xf32>
    %12 = tpu.matmul %11, %3, %cst_10 {dimension_numbers = #tpu.dot_dimension_numbers<[1], [0], [0], [1], [0, 0, 1, 1], [], []>} : vector<8x32xf32>, vector<32x32xf32>, vector<8x32xf32> -> vector<8x32xf32>
    %13 = vector.broadcast %4 : vector<1x32xf32> to vector<8x32xf32>
    %14 = arith.addf %12, %13 : vector<8x32xf32>
    %cst_11 = arith.constant 0.000000e+00 : f32
    %15 = vector.broadcast %cst_11 : f32 to vector<8x32xf32>
    %16 = arith.maximumf %14, %15 : vector<8x32xf32>
    %cst_12 = arith.constant dense<0.000000e+00> : vector<8x128xf32>
    %17 = tpu.matmul %16, %5, %cst_12 {dimension_numbers = #tpu.dot_dimension_numbers<[1], [0], [0], [1], [0, 0, 1, 1], [], []>} : vector<8x32xf32>, vector<32x128xf32>, vector<8x128xf32> -> vector<8x128xf32>
    %18 = vector.broadcast %6 : vector<1x128xf32> to vector<8x128xf32>
    %19 = arith.addf %17, %18 : vector<8x128xf32>
    %cst_13 = arith.constant 0.000000e+00 : f32
    %20 = vector.broadcast %cst_13 : f32 to vector<8x128xf32>
    %21 = arith.cmpf ogt, %19, %20 : vector<8x128xf32>
    %22 = arith.extui %21 : vector<8x128xi1> to vector<8x128xi32>
    %23 = arith.sitofp %22 : vector<8x128xi32> to vector<8x128xf32>
    %24 = tpu.iota {dimensions = array<i32: 1>} : vector<8x128xi32>
    %c64_i32 = arith.constant 64 : i32
    %25 = vector.broadcast %c64_i32 : i32 to vector<8x128xi32>
    %26 = arith.cmpi sge, %24, %25 : vector<8x128xi32>
    %cst_14 = arith.constant -1.000000e+30 : f32
    %27 = vector.broadcast %cst_14 : f32 to vector<8x128xf32>
    %28 = arith.select %26, %19, %27 : vector<8x128xi1>, vector<8x128xf32>
    %cst_15 = arith.constant dense<0xFF800000> : vector<8xf32>
    %29 = vector.multi_reduction <maximumf>, %28, %cst_15 [1] : vector<8x128xf32> to vector<8xf32>
    %30 = vector.shape_cast %29 : vector<8xf32> to vector<8x1xf32>
    %31 = vector.broadcast %30 : vector<8x1xf32> to vector<8x128xf32>
    %32 = arith.subf %28, %31 : vector<8x128xf32>
    %33 = math.exp %32 : vector<8x128xf32>
    %cst_16 = arith.constant dense<0.000000e+00> : vector<8xf32>
    %34 = vector.multi_reduction <add>, %33, %cst_16 [1] : vector<8x128xf32> to vector<8xf32>
    %35 = vector.shape_cast %34 : vector<8xf32> to vector<8x1xf32>
    %36 = vector.broadcast %35 : vector<8x1xf32> to vector<8x128xf32>
    %37 = arith.divf %33, %36 : vector<8x128xf32>
    %38 = arith.select %26, %37, %23 : vector<8x128xi1>, vector<8x128xf32>
    %c0_17 = arith.constant 0 : index
    %c0_18 = arith.constant 0 : index
    %39 = vector.load %arg4[%c0_17, %c0_18] : memref<8x128xf32, #tpu.memory_space<vmem>>, vector<8x128xf32>
    tpu.vector_store %arg4[%c0_17, %c0_18], %38 {strides = array<i32>} : memref<8x128xf32, #tpu.memory_space<vmem>>, vector<8x128xf32>,
    return
  }
  func.func @transform_0(%arg0: i32) -> (i32, i32) {
    %c0_i32 = arith.constant 0 : i32
    %c0_i32_0 = arith.constant 0 : i32
    return %arg0, %c0_i32 : i32, i32
  }
  func.func @transform_1(%arg0: i32) -> (i32, i32) {
    %c0_i32 = arith.constant 0 : i32
    %c0_i32_0 = arith.constant 0 : i32
    %c0_i32_1 = arith.constant 0 : i32
    return %c0_i32, %c0_i32_0 : i32, i32
  }
  func.func @transform_2(%arg0: i32) -> (i32, i32) {
    %c0_i32 = arith.constant 0 : i32
    %c0_i32_0 = arith.constant 0 : i32
    %c0_i32_1 = arith.constant 0 : i32
    return %c0_i32, %c0_i32_0 : i32, i32
  }
  func.func @transform_3(%arg0: i32) -> (i32, i32) {
    %c0_i32 = arith.constant 0 : i32
    %c0_i32_0 = arith.constant 0 : i32
    return %arg0, %c0_i32 : i32, i32
  }
}

</mosaic_0001>

<llo_original>
// kernel: tpu_custom_call.1
$region0: #{tpu_custom_call.1}
  #allocation0 [shape = 'u32[]', space=smem, size = 0x4, offset = 0x4, fixed_abs, tag = 'smem constant byte address 0x4 - core index']
  #allocation1 [shape = 'u32[144,128]{1,0:T(1,128)}', space=vmem, size = 0x12000, scoped, tag = 'internal scratch']
  %s0 = inlined_call_operand.vmem [shape: f32[8,8], index: 0, kind: input, shape index: {}]
  %s1 = inlined_call_operand.vmem [shape: f32[56,32], index: 1, kind: input, shape index: {}]
  %s2 = inlined_call_operand.vmem [shape: f32[40,128], index: 2, kind: input, shape index: {}]
  %s3 = inlined_call_operand.hbm [shape: f32[8,128], index: 3, kind: output, shape index: {}]
  %s4 = sld [smem:[#allocation0]]
  $region22: #{tpu_custom_call.1} parent=0
    _
  %s6 = ssub.s32 1, %s4
  %s7 = scalar_select 0, %s6, %s4
  $region1: #{tpu_custom_call.1} parent=0
    #allocation2 [shape = 'u8[4096]{0}', space=vmem, size = 0x1000, scoped, tag = 'output window, operand 0, single buffered']
    #allocation3 [shape = 's32[1]{0}', space=sflag, size = 0x4, scoped, tag = 'scoped memory for tpu_custom_call.1']
    %8 = vsyncpa [#allocation3], 0
    // Predicated region
    $region2: #{tpu_custom_call.1} parent=1 // pred_check
      _
    $region3: #{tpu_custom_call.1} parent=1 // pred_check_branch
      %10 = sbr.rel (0) target = $region5
    $region4: #{tpu_custom_call.1} parent=1 // pred_region
      _
    $region5: #{tpu_custom_call.1} parent=1 // pred_fallthru
      _
    // Predicated region
    $region6: #{tpu_custom_call.1} parent=1 // pred_check
      _
    $region7: #{tpu_custom_call.1} parent=1 // pred_check_branch
      %12 = sbr.rel (0) target = $region9
    $region8: #{tpu_custom_call.1} parent=1 // pred_region
      _
    $region9: #{tpu_custom_call.1} parent=1 // pred_fallthru
      _
    // Predicated region
    $region10: #{tpu_custom_call.1} parent=1 // pred_check
      _
    $region11: #{tpu_custom_call.1} parent=1 // pred_check_branch
      %14 = sbr.rel (0) target = $region13
    $region12: #{tpu_custom_call.1} parent=1 // pred_region
      _
    $region13: #{tpu_custom_call.1} parent=1 // pred_fallthru
      _
    %v15 = vld [vmem:[%s0] sm:$0xff]
    %v16 = vld [vmem:[%s1] sm:$0xff]
    %v17 = vld [vmem:[%s1 + $0x8] sm:$0x1]
    %v18 = vld [vmem:[%s1 + $0x10] sm:$0xff]
    %v19 = vld [vmem:[%s1 + $0x18] sm:$0xff]
    %v20 = vld [vmem:[%s1 + $0x20] sm:$0xff]
    %v21 = vld [vmem:[%s1 + $0x28] sm:$0xff]
    %v22 = vld [vmem:[%s1 + $0x30] sm:$0x1]
    %v23 = vld [vmem:[%s2] sm:$0xff]
    %v24 = vld [vmem:[%s2 + $0x8] sm:$0xff]
    %v25 = vld [vmem:[%s2 + $0x10] sm:$0xff]
    %v26 = vld [vmem:[%s2 + $0x18] sm:$0xff]
    %v27 = vld [vmem:[%s2 + $0x20] sm:$0x1]
    %v28 = vlaneseq
    %v29 = vshrl.u32 %v28, 7
    %v30 = vsub.s32 0, %v29
    %v31 = vrot.slane %v17, %v30
    %vm32 = vcmask 64512
    %v34 = vsel %vm32, %v15, 0
    %36 = vmatprep.subr.mxu0 0.0
    %37 = vmatpush1.msra.mxu0 0.0
    %38 = vmatprep.subr.mxu0 0.0
    %39 = vmatpush1.msra.mxu0 0.0
    %40 = vmatprep.subr.mxu0 0.0
    %41 = vmatpush1.msra.mxu0 0.0
    %42 = vmatprep.subr.mxu0 0.0
    %43 = vmatpush1.msra.mxu0 0.0
    %44 = vmatprep.subr.mxu0 0.0
    %45 = vmatpush1.msra.mxu0 0.0
    %46 = vmatprep.subr.mxu0 0.0
    %47 = vmatpush1.msra.mxu0 0.0
    %48 = vmatprep.subr.mxu0 0.0
    %49 = vmatpush1.msra.mxu0 0.0
    %50 = vmatprep.subr.mxu0 0.0
    %51 = vmatpush1.msra.mxu0 0.0
    %52 = vmatprep.subr.mxu0 0.0
    %53 = vmatpush1.msra.mxu0 0.0
    %54 = vmatprep.subr.mxu0 0.0
    %55 = vmatpush1.msra.mxu0 0.0
    %56 = vmatprep.subr.mxu0 0.0
    %57 = vmatpush1.msra.mxu0 0.0
    %58 = vmatprep.subr.mxu0 0.0
    %59 = vmatpush1.msra.mxu0 0.0
    %60 = vmatprep.subr.mxu0 0.0
    %61 = vmatpush1.msra.mxu0 0.0
    %62 = vmatprep.subr.mxu0 0.0
    %63 = vmatpush1.msra.mxu0 0.0
    %64 = vmatprep.subr.mxu0 0.0
    %65 = vmatpush1.msra.mxu0 0.0
    %66 = vmatprep.subr.mxu0 0.0
    %67 = vmatpush1.msra.mxu0 %v16
    %68 = vmatprep.subr.mxu0 0.0
    %69 = vmatpush2.msra.mxu0 0.0
    %70 = vmatprep.subr.mxu0 0.0
    %71 = vmatpush2.msra.mxu0 0.0
    %72 = vmatprep.subr.mxu0 0.0
    %73 = vmatpush2.msra.mxu0 0.0
    %74 = vmatprep.subr.mxu0 0.0
    %75 = vmatpush2.msra.mxu0 0.0
    %76 = vmatprep.subr.mxu0 0.0
    %77 = vmatpush2.msra.mxu0 0.0
    %78 = vmatprep.subr.mxu0 0.0
    %79 = vmatpush2.msra.mxu0 0.0
    %80 = vmatprep.subr.mxu0 0.0
    %81 = vmatpush2.msra.mxu0 0.0
    %82 = vmatprep.subr.mxu0 0.0
    %83 = vmatpush2.msra.mxu0 0.0
    %84 = vmatprep.subr.mxu0 0.0
    %85 = vmatpush2.msra.mxu0 0.0
    %86 = vmatprep.subr.mxu0 0.0
    %87 = vmatpush2.msra.mxu0 0.0
    %88 = vmatprep.subr.mxu0 0.0
    %89 = vmatpush2.msra.mxu0 0.0
    %90 = vmatprep.subr.mxu0 0.0
    %91 = vmatpush2.msra.mxu0 0.0
    %92 = vmatprep.subr.mxu0 0.0
    %93 = vmatpush2.msra.mxu0 0.0
    %94 = vmatprep.subr.mxu0 0.0
    %95 = vmatpush2.msra.mxu0 0.0
    %96 = vmatprep.subr.mxu0 0.0
    %97 = vmatpush2.msra.mxu0 0.0
    %98 = vmatprep.subr.mxu0 0.0
    %99 = vmatpush2.msra.mxu0 0.0
    %100 = vmatprep.mubr.f32.mxu0 0.0
    %101 = vmatmul.mubr.f32.gmra.mxu0 %v34
    %v102 = vpop.f32.mrf.mxu0
    %v103 = vadd.f32 %v31, %v102
    %v104 = vpop.f32.mrf.mxu0
    %105 = vdwg.mxu0
    %v106 = vmax.f32 %v103, 0.0
    %v107 = vlaneseq
    %v108 = vshrl.u32 %v107, 7
    %v109 = vsub.s32 0, %v108
    %v110 = vrot.slane %v22, %v109
    %vm111 = vcmask 261120
    %v113 = vsel %vm111, %v106, 0
    %115 = vmatprep.subr.mxu0 0.0
    %116 = vmatpush1.msra.mxu0 0.0
    %117 = vmatprep.subr.mxu0 0.0
    %118 = vmatpush1.msra.mxu0 0.0
    %119 = vmatprep.subr.mxu0 0.0
    %120 = vmatpush1.msra.mxu0 0.0
    %121 = vmatprep.subr.mxu0 0.0
    %122 = vmatpush1.msra.mxu0 0.0
    %123 = vmatprep.subr.mxu0 0.0
    %124 = vmatpush1.msra.mxu0 0.0
    %125 = vmatprep.subr.mxu0 0.0
    %126 = vmatpush1.msra.mxu0 0.0
    %127 = vmatprep.subr.mxu0 0.0
    %128 = vmatpush1.msra.mxu0 0.0
    %129 = vmatprep.subr.mxu0 0.0
    %130 = vmatpush1.msra.mxu0 0.0
    %131 = vmatprep.subr.mxu0 0.0
    %132 = vmatpush1.msra.mxu0 0.0
    %133 = vmatprep.subr.mxu0 0.0
    %134 = vmatpush1.msra.mxu0 0.0
    %135 = vmatprep.subr.mxu0 0.0
    %136 = vmatpush1.msra.mxu0 0.0
    %137 = vmatprep.subr.mxu0 0.0
    %138 = vmatpush1.msra.mxu0 0.0
    %139 = vmatprep.subr.mxu0 0.0
    %140 = vmatpush1.msra.mxu0 %v21
    %141 = vmatprep.subr.mxu0 0.0
    %142 = vmatpush1.msra.mxu0 %v20
    %143 = vmatprep.subr.mxu0 0.0
    %144 = vmatpush1.msra.mxu0 %v19
    %145 = vmatprep.subr.mxu0 0.0
    %146 = vmatpush1.msra.mxu0 %v18
    %147 = vmatprep.subr.mxu0 0.0
    %148 = vmatpush2.msra.mxu0 0.0
    %149 = vmatprep.subr.mxu0 0.0
    %150 = vmatpush2.msra.mxu0 0.0
    %151 = vmatprep.subr.mxu0 0.0
    %152 = vmatpush2.msra.mxu0 0.0
    %153 = vmatprep.subr.mxu0 0.0
    %154 = vmatpush2.msra.mxu0 0.0
    %155 = vmatprep.subr.mxu0 0.0
    %156 = vmatpush2.msra.mxu0 0.0
    %157 = vmatprep.subr.mxu0 0.0
    %158 = vmatpush2.msra.mxu0 0.0
    %159 = vmatprep.subr.mxu0 0.0
    %160 = vmatpush2.msra.mxu0 0.0
    %161 = vmatprep.subr.mxu0 0.0
    %162 = vmatpush2.msra.mxu0 0.0
    %163 = vmatprep.subr.mxu0 0.0
    %164 = vmatpush2.msra.mxu0 0.0
    %165 = vmatprep.subr.mxu0 0.0
    %166 = vmatpush2.msra.mxu0 0.0
    %167 = vmatprep.subr.mxu0 0.0
    %168 = vmatpush2.msra.mxu0 0.0
    %169 = vmatprep.subr.mxu0 0.0
    %170 = vmatpush2.msra.mxu0 0.0
    %171 = vmatprep.subr.mxu0 0.0
    %172 = vmatpush2.msra.mxu0 0.0
    %173 = vmatprep.subr.mxu0 0.0
    %174 = vmatpush2.msra.mxu0 0.0
    %175 = vmatprep.subr.mxu0 0.0
    %176 = vmatpush2.msra.mxu0 0.0
    %177 = vmatprep.subr.mxu0 0.0
    %178 = vmatpush2.msra.mxu0 0.0
    %179 = vmatprep.mubr.f32.mxu0 0.0
    %180 = vmatmul.mubr.f32.gmra.mxu0 %v113
    %v181 = vpop.f32.mrf.mxu0
    %v182 = vadd.f32 %v110, %v181
    %v183 = vpop.f32.mrf.mxu0
    %184 = vdwg.mxu0
    %v185 = vmax.f32 %v182, 0.0
    %v186 = vlaneseq
    %v187 = vshrl.u32 %v186, 7
    %v188 = vsub.s32 0, %v187
    %v189 = vrot.slane %v27, %v188
    %v191 = vsel %vm111, %v185, 0
    %193 = vmatprep.subr.mxu0 0.0
    %194 = vmatpush1.msra.mxu0 0.0
    %195 = vmatprep.subr.mxu0 0.0
    %196 = vmatpush1.msra.mxu0 0.0
    %197 = vmatprep.subr.mxu0 0.0
    %198 = vmatpush1.msra.mxu0 0.0
    %199 = vmatprep.subr.mxu0 0.0
    %200 = vmatpush1.msra.mxu0 0.0
    %201 = vmatprep.subr.mxu0 0.0
    %202 = vmatpush1.msra.mxu0 0.0
    %203 = vmatprep.subr.mxu0 0.0
    %204 = vmatpush1.msra.mxu0 0.0
    %205 = vmatprep.subr.mxu0 0.0
    %206 = vmatpush1.msra.mxu0 0.0
    %207 = vmatprep.subr.mxu0 0.0
    %208 = vmatpush1.msra.mxu0 0.0
    %209 = vmatprep.subr.mxu0 0.0
    %210 = vmatpush1.msra.mxu0 0.0
    %211 = vmatprep.subr.mxu0 0.0
    %212 = vmatpush1.msra.mxu0 0.0
    %213 = vmatprep.subr.mxu0 0.0
    %214 = vmatpush1.msra.mxu0 0.0
    %215 = vmatprep.subr.mxu0 0.0
    %216 = vmatpush1.msra.mxu0 0.0
    %217 = vmatprep.subr.mxu0 0.0
    %218 = vmatpush1.msra.mxu0 %v26
    %219 = vmatprep.subr.mxu0 0.0
    %220 = vmatpush1.msra.mxu0 %v25
    %221 = vmatprep.subr.mxu0 0.0
    %222 = vmatpush1.msra.mxu0 %v24
    %223 = vmatprep.subr.mxu0 0.0
    %224 = vmatpush1.msra.mxu0 %v23
    %225 = vmatprep.subr.mxu0 0.0
    %226 = vmatpush2.msra.mxu0 0.0
    %227 = vmatprep.subr.mxu0 0.0
    %228 = vmatpush2.msra.mxu0 0.0
    %229 = vmatprep.subr.mxu0 0.0
    %230 = vmatpush2.msra.mxu0 0.0
    %231 = vmatprep.subr.mxu0 0.0
    %232 = vmatpush2.msra.mxu0 0.0
    %233 = vmatprep.subr.mxu0 0.0
    %234 = vmatpush2.msra.mxu0 0.0
    %235 = vmatprep.subr.mxu0 0.0
    %236 = vmatpush2.msra.mxu0 0.0
    %237 = vmatprep.subr.mxu0 0.0
    %238 = vmatpush2.msra.mxu0 0.0
    %239 = vmatprep.subr.mxu0 0.0
    %240 = vmatpush2.msra.mxu0 0.0
    %241 = vmatprep.subr.mxu0 0.0
    %242 = vmatpush2.msra.mxu0 0.0
    %243 = vmatprep.subr.mxu0 0.0
    %244 = vmatpush2.msra.mxu0 0.0
    %245 = vmatprep.subr.mxu0 0.0
    %246 = vmatpush2.msra.mxu0 0.0
    %247 = vmatprep.subr.mxu0 0.0
    %248 = vmatpush2.msra.mxu0 0.0
    %249 = vmatprep.subr.mxu0 0.0
    %250 = vmatpush2.msra.mxu0 0.0
    %251 = vmatprep.subr.mxu0 0.0
    %252 = vmatpush2.msra.mxu0 0.0
    %253 = vmatprep.subr.mxu0 0.0
    %254 = vmatpush2.msra.mxu0 0.0
    %255 = vmatprep.subr.mxu0 0.0
    %256 = vmatpush2.msra.mxu0 0.0
    %257 = vmatprep.mubr.f32.mxu0 0.0
    %258 = vmatmul.mubr.f32.gmra.mxu0 %v191
    %v259 = vpop.f32.mrf.mxu0
    %v260 = vadd.f32 %v189, %v259
    %v261 = vpop.f32.mrf.mxu0
    %262 = vdwg.mxu0
    %vm263 = vcmp.gt.f32.partialorder %v260, 0.0
    %v264 = vsel %vm263, 1, 0
    %v265 = vcvt.s32.f32 %v264
    %v266 = vlaneseq
    %v267 = vand.u32 %v266, 127
    %vm268 = vcmp.ge.s32.totalorder %v267, 64
    %v269 = vsel %vm268, %v260, -1e+30
    %270 = vmax.xlane.f32.xlu0 %v269
    %v271 = vpop.xlane.xlu0 %270
    %v272 = vsub.f32 %v269, %v271
    %v273 = vmul.f32 %v272, 1.442695
    %v274 = vpow.pop %v273
    %275 = vadd.xlane.f32.xlu0 %v274
    %v276 = vpop.xlane.xlu0 %275
    %v277 = vrcp.pop %v276
    %v278 = vmul.f32 %v274, %v277
    %v279 = vsel %vm268, %v278, %v265
    %280 = vst [vmem:[#allocation2] sm:$0xff] %v279
    // Predicated region
    $region14: #{tpu_custom_call.1} parent=1 // pred_check
      _
    $region15: #{tpu_custom_call.1} parent=1 // pred_check_branch
      %282 = sbr.rel (0) target = $region17
    $region16: #{tpu_custom_call.1} parent=1 // pred_region
      %s284 = ssub.s32 128, 128
      %285 = vsyncadd [#allocation3], %s284
      %s287 = sshll.u32 [#allocation2], 4
      %s288 = int_to_ptr.vmem [resolvable:$true] %s287
      %290 = dma.vmem_to_hbm [thread:$0]  %s288, 128, %s3, [#allocation3]
    $region17: #{tpu_custom_call.1} parent=1 // pred_fallthru
      _
    // Predicated region
    $region18: #{tpu_custom_call.1} parent=1 // pred_check
      _
    $region19: #{tpu_custom_call.1} parent=1 // pred_check_branch
      %292 = sbr.rel (0) target = $region21
    $region20: #{tpu_custom_call.1} parent=1 // pred_region
      %293 = dma.done [#allocation3], 128
    $region21: #{tpu_custom_call.1} parent=1 // pred_fallthru
      _
    %294 = vsyncpa [#allocation3], 1

</llo_original>
